<compile_context>
chip_gen: v6e
topology: v6e:2x2x1
jax: 0.10.0
libtpu: 0.0.40
codegen_flags: <defaults>
</compile_context>

<pallas_src>
import functools

import jax
import jax.numpy as jnp
from jax.experimental import pallas as pl
from jax.experimental.pallas import tpu as pltpu


def _round_up(x, m):
    return ((x + m - 1) // m) * m


def _conv_gemm_kernel(w_ref, p_ref, b_ref, o_ref):
    # w_ref: (outC_pad, K_pad)   weight, resident across grid steps
    # p_ref: (K_pad, tm)         patch tile (K on sublanes, M on lanes)
    # b_ref: (outC_pad, 1)       bias
    # o_ref: (outC_pad, tm)      lane-dense output tile
    acc = jnp.dot(w_ref[...], p_ref[...], preferred_element_type=jnp.float32)
    o_ref[...] = (acc + b_ref[...]).astype(o_ref.dtype)


def conv2d_pallas(x, w, b, *, stride=1, padding=0, dilation=1, tm=256,
                  use_bf16=False):
    """Conv2d forward matching torch.nn.Conv2d semantics (NCHW in/out)."""
    N, C, H, W = x.shape
    outC, inC, KH, KW = w.shape
    assert C == inC, "channel mismatch"

    OH = (H + 2 * padding - dilation * (KH - 1) - 1) // stride + 1
    OW = (W + 2 * padding - dilation * (KW - 1) - 1) // stride + 1

    xp = jnp.pad(x, ((0, 0), (0, 0), (padding, padding), (padding, padding)))

    # --- im2col glue (not the hot path) -> (K, M) with K ordered (C, KH, KW)
    #     to match PyTorch's weight.reshape(outC, C*KH*KW), M ordered (N,OH,OW).
    slices = []
    for kh in range(KH):
        for kw in range(KW):
            h0 = kh * dilation
            w0 = kw * dilation
            sl = jax.lax.slice(
                xp,
                (0, 0, h0, w0),
                (N, C, h0 + (OH - 1) * stride + 1, w0 + (OW - 1) * stride + 1),
                (1, 1, stride, stride),
            )  # (N, C, OH, OW)
            slices.append(sl)
    patches = jnp.stack(slices, axis=0).reshape(KH, KW, N, C, OH, OW)
    # -> (C, KH, KW, N, OH, OW) -> (K, M)
    patches_t = jnp.transpose(patches, (3, 0, 1, 2, 4, 5))

    K = C * KH * KW
    M = N * OH * OW
    patches_t = patches_t.reshape(K, M)

    w_mat = w.reshape(outC, K)    # (outC, K)
    b_mat = b.reshape(outC, 1)    # (outC, 1)

    # --- TPU-friendly padding: sublane-align K and outC, lane-align M to tm.
    K_pad = _round_up(K, 8)
    outC_pad = _round_up(outC, 8)
    M_pad = _round_up(M, tm)

    if K_pad != K or M_pad != M:
        patches_t = jnp.pad(patches_t, ((0, K_pad - K), (0, M_pad - M)))
    if outC_pad != outC or K_pad != K:
        w_mat = jnp.pad(w_mat, ((0, outC_pad - outC), (0, K_pad - K)))
    if outC_pad != outC:
        b_mat = jnp.pad(b_mat, ((0, outC_pad - outC), (0, 0)))

    if use_bf16:
        # Optional: faster MXU path on v6e/v7x; slight deviation from f32 ref.
        patches_t = patches_t.astype(jnp.bfloat16)
        w_mat = w_mat.astype(jnp.bfloat16)

    grid_m = M_pad // tm

    cost = pl.CostEstimate(
        flops=2 * M_pad * K_pad * outC_pad,
        transcendentals=0,
        bytes_accessed=4 * (K_pad * M_pad + outC_pad * K_pad
                            + outC_pad + outC_pad * M_pad),
    )

    out = pl.pallas_call(
        _conv_gemm_kernel,
        out_shape=jax.ShapeDtypeStruct((outC_pad, M_pad), x.dtype),
        grid_spec=pltpu.PrefetchScalarGridSpec(
            num_scalar_prefetch=0,
            grid=(grid_m,),
            in_specs=[
                pl.BlockSpec((outC_pad, K_pad), lambda i: (0, 0)),  # weight (resident)
                pl.BlockSpec((K_pad, tm), lambda i: (0, i)),        # patch tile
                pl.BlockSpec((outC_pad, 1), lambda i: (0, 0)),      # bias (resident)
            ],
            out_specs=pl.BlockSpec((outC_pad, tm), lambda i: (0, i)),
        ),
        compiler_params=pltpu.CompilerParams(
            dimension_semantics=("parallel",),
            vmem_limit_bytes=64 * 1024 * 1024,
        ),
        cost_estimate=cost,
    )(w_mat, patches_t, b_mat)

    # (outC, M) -> NCHW; transpose only swaps small leading dims.
    out = out[:outC, :M].reshape(outC, N, OH, OW)
    return jnp.transpose(out, (1, 0, 2, 3))


if __name__ == "__main__":
    # module config: conv_op(inC=4, outC=8, kernel_size=3, stride=1, padding=1)
    N, inC, H, W = 2, 4, 16, 16
    outC, KH, KW = 8, 3, 3
    stride, padding, dilation = 1, 1, 1

    key = jax.random.PRNGKey(0)
    kx, kw, kb = jax.random.split(key, 3)

    x = jax.random.normal(kx, (N, inC, H, W), dtype=jnp.float32)
    # deterministic parameter init (Conv2d-like uniform fan-in scaling)
    fan_in = inC * KH * KW
    bound = 1.0 / (fan_in ** 0.5)
    w = jax.random.uniform(kw, (outC, inC, KH, KW), dtype=jnp.float32,
                           minval=-bound, maxval=bound)
    b = jax.random.uniform(kb, (outC,), dtype=jnp.float32,
                           minval=-bound, maxval=bound)

    conv_fn = jax.jit(functools.partial(
        conv2d_pallas, stride=stride, padding=padding, dilation=dilation))

    y = conv_fn(x, w, b)
    y = jax.block_until_ready(y)

    # sanity check against XLA's conv (same semantics as nn.Conv2d)
    y_ref = jax.lax.conv_general_dilated(
        x, w, window_strides=(stride, stride),
        padding=[(padding, padding), (padding, padding)],
        rhs_dilation=(dilation, dilation),
        dimension_numbers=("NCHW", "OIHW", "NCHW"),
    ) + b.reshape(1, outC, 1, 1)
    assert y.shape == (N, outC, H, W)
    assert jnp.allclose(y, y_ref, rtol=1e-5, atol=1e-5)

    print("KERNEL_OK")
</pallas_src>

<mosaic_0001>
module attributes {stable_mosaic.version = 11 : i64} {
  func.func @_conv_gemm_kernel(%arg0: i32, %arg1: memref<8x40xf32, #tpu.memory_space<vmem>>, %arg2: memref<40x256xf32, #tpu.memory_space<vmem>>, %arg3: memref<8x1xf32, #tpu.memory_space<vmem>>, %arg4: memref<8x256xf32, #tpu.memory_space<vmem>>) attributes {dimension_semantics = [#tpu.dimension_semantics<parallel>], iteration_bounds = array<i64: 2>, scalar_prefetch = 0 : i64, scratch_operands = 0 : i64, tpu.core_type = #tpu.core_type<tc>, window_params = [{pipeline_mode = #tpu.pipeline_mode<synchronous>, transform_indices = @transform_0, window_bounds = array<i64: 8, 40>}, {transform_indices = @transform_1, window_bounds = array<i64: 40, 256>}, {pipeline_mode = #tpu.pipeline_mode<synchronous>, transform_indices = @transform_2, window_bounds = array<i64: 8, 1>}, {transform_indices = @transform_3, window_bounds = array<i64: 8, 256>}]} {
    %c0 = arith.constant 0 : index
    %c0_0 = arith.constant 0 : index
    %0 = vector.load %arg1[%c0, %c0_0] : memref<8x40xf32, #tpu.memory_space<vmem>>, vector<8x40xf32>
    %c0_1 = arith.constant 0 : index
    %c0_2 = arith.constant 0 : index
    %1 = vector.load %arg2[%c0_1, %c0_2] : memref<40x256xf32, #tpu.memory_space<vmem>>, vector<40x256xf32>
    %cst = arith.constant dense<0.000000e+00> : vector<8x256xf32>
    %2 = tpu.matmul %0, %1, %cst {dimension_numbers = #tpu.dot_dimension_numbers<[1], [0], [0], [1], [0, 0, 1, 1], [], []>} : vector<8x40xf32>, vector<40x256xf32>, vector<8x256xf32> -> vector<8x256xf32>
    %c0_3 = arith.constant 0 : index
    %c0_4 = arith.constant 0 : index
    %3 = vector.load %arg3[%c0_3, %c0_4] : memref<8x1xf32, #tpu.memory_space<vmem>>, vector<8x1xf32>
    %4 = vector.broadcast %3 : vector<8x1xf32> to vector<8x256xf32>
    %5 = arith.addf %2, %4 : vector<8x256xf32>
    %c0_5 = arith.constant 0 : index
    %c0_6 = arith.constant 0 : index
    %6 = vector.load %arg4[%c0_5, %c0_6] : memref<8x256xf32, #tpu.memory_space<vmem>>, vector<8x256xf32>
    tpu.vector_store %arg4[%c0_5, %c0_6], %5 {strides = array<i32>} : memref<8x256xf32, #tpu.memory_space<vmem>>, vector<8x256xf32>,
    return
  }
  func.func @transform_0(%arg0: i32) -> (i32, i32) {
    %c0_i32 = arith.constant 0 : i32
    %c0_i32_0 = arith.constant 0 : i32
    %c0_i32_1 = arith.constant 0 : i32
    return %c0_i32, %c0_i32_0 : i32, i32
  }
  func.func @transform_1(%arg0: i32) -> (i32, i32) {
    %c0_i32 = arith.constant 0 : i32
    %c0_i32_0 = arith.constant 0 : i32
    return %c0_i32, %arg0 : i32, i32
  }
  func.func @transform_2(%arg0: i32) -> (i32, i32) {
    %c0_i32 = arith.constant 0 : i32
    %c0_i32_0 = arith.constant 0 : i32
    %c0_i32_1 = arith.constant 0 : i32
    return %c0_i32, %c0_i32_0 : i32, i32
  }
  func.func @transform_3(%arg0: i32) -> (i32, i32) {
    %c0_i32 = arith.constant 0 : i32
    %c0_i32_0 = arith.constant 0 : i32
    return %c0_i32, %arg0 : i32, i32
  }
}

</mosaic_0001>

<llo_original>
// kernel: conv2d_pallas.1
$region0: #{conv2d_pallas.1}
  #allocation0 [shape = 'u32[]', space=smem, size = 0x4, offset = 0x4, fixed_abs, tag = 'smem constant byte address 0x4 - core index']
  #allocation1 [shape = 'u32[144,128]{1,0:T(1,128)}', space=vmem, size = 0x12000, scoped, tag = 'internal scratch']
  %s0 = inlined_call_operand.vmem [shape: f32[8,40], index: 0, kind: input, shape index: {}]
  %s1 = inlined_call_operand.vmem [shape: f32[40,512], index: 1, kind: input, shape index: {}]
  %s2 = inlined_call_operand.vmem [shape: f32[8,1], index: 2, kind: input, shape index: {}]
  %s3 = inlined_call_operand.vmem [shape: f32[8,512], index: 3, kind: output, shape index: {}]
  %s4 = sld [smem:[#allocation0]]
  $region68: #{conv2d_pallas.1} parent=0
    _
  %s6 = ssub.s32 1, %s4
  %s7 = scalar_select 0, %s6, %s4
  $region1: #{conv2d_pallas.1} parent=0
    #allocation2 [shape = 'u8[81920]{0}', space=vmem, size = 0x14000, scoped, tag = 'input window, operand 1']
    loop: start=0, step=1, limit=4
    $region2: #{conv2d_pallas.1} parent=1 // loop_pre_header
      _
    $region3: #{conv2d_pallas.1} parent=1 // loop_header
      %s9 = sphi 0, %s13
      %p10 = scmp.ge.s32.totalorder %s9, 4
      %s17 = sphi 0, %s17
      %s19 = sphi 0, %s17
      %s20 = sphi 0, %s19
      %s34 = sphi 0, %s20
      %s40 = sphi 0, %s42
      %s43 = sphi 0, %s40
      %s44 = sphi 0, %s43
      %s60 = sphi 0, %s44
      %s64 = sphi 0, %s64
      %s66 = sphi 0, %s64
      %s67 = sphi 0, %s66
      %s81 = sphi 0, %s67
      %s87 = sphi 0, %s89
      %s90 = sphi 0, %s87
      %s91 = sphi 0, %s90
      %s107 = sphi 0, %s91
    $region4: #{conv2d_pallas.1} parent=1 // loop_header_branch
      %12 = sbr.rel (%p10) target = $region8
    $region5: #{conv2d_pallas.1} parent=1 // loop_body
      %s14 = ssub.s32 %s9, 1
      %s15 = ssub.s32 %s9, 2
      %s16 = sadd.s32 %s9, 1
      %s18 = sadd.s32 %s17, 1
      %p21 = scmp.eq.s32.totalorder %s9, 1
      %p22 = scmp.ne.s32.totalorder %s17, %s19
      %p23 = scmp.eq.s32.totalorder %s9, 0
      %p24 = por %p22, %p23
      %p25 = scmp.ne.s32.totalorder %s17, %s19
      %p26 = scmp.eq.s32.totalorder %s14, 1
      %p27 = por %p25, %p26
      %p28 = scmp.ne.s32.totalorder %s19, %s20
      %p29 = scmp.eq.s32.totalorder %s14, 0
      %p30 = por %p28, %p29
      %p31 = scmp.ne.s32.totalorder %s19, %s20
      %p32 = scmp.eq.s32.totalorder %s15, 1
      %p33 = por %p31, %p32
      %p35 = scmp.ne.s32.totalorder %s20, %s34
      %p36 = scmp.eq.s32.totalorder %s15, 0
      %p37 = por %p35, %p36
      %s38 = ssub.s32 %s9, %s16
      %p39 = scmp.eq.s32.totalorder %s38, 0
      %s41 = sadd.s32 %s40, 1
      %s42 = scalar_select %p39, %s40, %s41
      %p45 = pneg %p39
      %p46 = scmp.eq.s32.totalorder %s9, 1
      %p47 = por %p45, %p46
      %p48 = scmp.ne.s32.totalorder %s40, %s43
      %p49 = scmp.eq.s32.totalorder %s9, 0
      %p50 = por %p48, %p49
      %p51 = scmp.ne.s32.totalorder %s40, %s43
      %p52 = scmp.eq.s32.totalorder %s14, 1
      %p53 = por %p51, %p52
      %p54 = scmp.ne.s32.totalorder %s43, %s44
      %p55 = scmp.eq.s32.totalorder %s14, 0
      %p56 = por %p54, %p55
      %p57 = scmp.ne.s32.totalorder %s43, %s44
      %p58 = scmp.eq.s32.totalorder %s15, 1
      %p59 = por %p57, %p58
      %p61 = scmp.ne.s32.totalorder %s44, %s60
      %p62 = scmp.eq.s32.totalorder %s15, 0
      %p63 = por %p61, %p62
      %s65 = sadd.s32 %s64, 1
      %p68 = scmp.eq.s32.totalorder %s9, 1
      %p69 = scmp.ne.s32.totalorder %s64, %s66
      %p70 = scmp.eq.s32.totalorder %s9, 0
      %p71 = por %p69, %p70
      %p72 = scmp.ne.s32.totalorder %s64, %s66
      %p73 = scmp.eq.s32.totalorder %s14, 1
      %p74 = por %p72, %p73
      %p75 = scmp.ne.s32.totalorder %s66, %s67
      %p76 = scmp.eq.s32.totalorder %s14, 0
      %p77 = por %p75, %p76
      %p78 = scmp.ne.s32.totalorder %s66, %s67
      %p79 = scmp.eq.s32.totalorder %s15, 1
      %p80 = por %p78, %p79
      %p82 = scmp.ne.s32.totalorder %s67, %s81
      %p83 = scmp.eq.s32.totalorder %s15, 0
      %p84 = por %p82, %p83
      %s85 = ssub.s32 %s9, %s16
      %p86 = scmp.eq.s32.totalorder %s85, 0
      %s88 = sadd.s32 %s87, 1
      %s89 = scalar_select %p86, %s87, %s88
      %p92 = pneg %p86
      %p93 = scmp.eq.s32.totalorder %s9, 1
      %p94 = por %p92, %p93
      %p95 = scmp.ne.s32.totalorder %s87, %s90
      %p96 = scmp.eq.s32.totalorder %s9, 0
      %p97 = por %p95, %p96
      %p98 = scmp.ne.s32.totalorder %s87, %s90
      %p99 = scmp.eq.s32.totalorder %s14, 1
      %p100 = por %p98, %p99
      %p101 = scmp.ne.s32.totalorder %s90, %s91
      %p102 = scmp.eq.s32.totalorder %s14, 0
      %p103 = por %p101, %p102
      %p104 = scmp.ne.s32.totalorder %s90, %s91
      %p105 = scmp.eq.s32.totalorder %s15, 1
      %p106 = por %p104, %p105
      %p108 = scmp.ne.s32.totalorder %s91, %s107
      %p109 = scmp.eq.s32.totalorder %s15, 0
      %p110 = por %p108, %p109
      %p111 = scmp.le.s32.totalorder 1, %s9
      %p112 = scmp.lt.s32.totalorder %s9, 3
      %p113 = pnand %p111, %p112
      %p114 = pneg %p113
      // Predicated region
      $region9: #{conv2d_pallas.1} parent=5 // pred_check
        _
      $region10: #{conv2d_pallas.1} parent=5 // pred_check_branch
        %116 = sbr.rel (%p113) target = $region12
      $region11: #{conv2d_pallas.1} parent=5 // pred_region
        %s117 = ssub.s32 %s9, 1
        // Predicated region
        $region13: #{conv2d_pallas.1} parent=11 // pred_check
          %p118 = pneg %p30
        $region14: #{conv2d_pallas.1} parent=11 // pred_check_branch
          %120 = sbr.rel (%p118) target = $region16
        $region15: #{conv2d_pallas.1} parent=11 // pred_region
          _
        $region16: #{conv2d_pallas.1} parent=11 // pred_fallthru
          _
        // Predicated region
        $region17: #{conv2d_pallas.1} parent=11 // pred_check
          %p121 = pneg %p77
        $region18: #{conv2d_pallas.1} parent=11 // pred_check_branch
          %123 = sbr.rel (%p121) target = $region20
        $region19: #{conv2d_pallas.1} parent=11 // pred_region
          _
        $region20: #{conv2d_pallas.1} parent=11 // pred_fallthru
          _
      $region12: #{conv2d_pallas.1} parent=5 // pred_fallthru
        _
      %p124 = scmp.lt.s32.totalorder %s9, 2
      // Predicated region
      $region21: #{conv2d_pallas.1} parent=5 // pred_check
        %p125 = pneg %p124
      $region22: #{conv2d_pallas.1} parent=5 // pred_check_branch
        %127 = sbr.rel (%p125) target = $region24
      $region23: #{conv2d_pallas.1} parent=5 // pred_region
        // Predicated region
        $region25: #{conv2d_pallas.1} parent=23 // pred_check
          %p128 = pneg %p50
        $region26: #{conv2d_pallas.1} parent=23 // pred_check_branch
          %130 = sbr.rel (%p128) target = $region28
        $region27: #{conv2d_pallas.1} parent=23 // pred_region
          %s131 = sand.u32 %s40, 1
          %s132 = sand.u32 %s40, 1
          %s133 = smul.addr %s132, 80
          %s134 = scalar_lea.vmem [#allocation2], %s133
          %s135 = smul.u32 2, %s9
          %s136 = smul.addr %s135, 8
          %s137 = scalar_lea.vmem %s1, %s136
          // Predicated region
          $region29: #{conv2d_pallas.1} parent=27 // pred_check
            _
          $region30: #{conv2d_pallas.1} parent=27 // pred_check_branch
            %139 = sbr.rel (0) target = $region32
          $region31: #{conv2d_pallas.1} parent=27 // pred_region
            // Predicated region
            $region33: #{conv2d_pallas.1} parent=31 // pred_check
              _
            $region34: #{conv2d_pallas.1} parent=31 // pred_check_branch
              %141 = sbr.rel (0) target = $region36
            $region35: #{conv2d_pallas.1} parent=31 // pred_region
              loop: start=0, step=1, limit=1
              $region37: #{conv2d_pallas.1} parent=35 // loop_pre_header
                _
              $region38: #{conv2d_pallas.1} parent=35 // loop_header
                %s143 = sphi 0, %s147
                %p144 = scmp.ge.s32.totalorder %s143, 1
                %s148 = sphi %s137, %s137
                %s149 = sphi %s134, %s134
              $region39: #{conv2d_pallas.1} parent=35 // loop_header_branch
                %146 = sbr.rel (%p144) target = $region43
              $region40: #{conv2d_pallas.1} parent=35 // loop_body
                %v150 = vld [vmem:[%s148] sm:$0xff]
                %151 = vst [vmem:[%s149] sm:$0xff] %v150
                %v152 = vld [vmem:[%s148 + $0x8] sm:$0xff]
                %153 = vst [vmem:[%s149 + $0x8] sm:$0xff] %v152
                %v154 = vld [vmem:[%s148 + $0x20] sm:$0xff]
                %155 = vst [vmem:[%s149 + $0x10] sm:$0xff] %v154
                %v156 = vld [vmem:[%s148 + $0x28] sm:$0xff]
                %157 = vst [vmem:[%s149 + $0x18] sm:$0xff] %v156
                %v158 = vld [vmem:[%s148 + $0x40] sm:$0xff]
                %159 = vst [vmem:[%s149 + $0x20] sm:$0xff] %v158
                %v160 = vld [vmem:[%s148 + $0x48] sm:$0xff]
                %161 = vst [vmem:[%s149 + $0x28] sm:$0xff] %v160
                %v162 = vld [vmem:[%s148 + $0x60] sm:$0xff]
                %163 = vst [vmem:[%s149 + $0x30] sm:$0xff] %v162
                %v164 = vld [vmem:[%s148 + $0x68] sm:$0xff]
                %165 = vst [vmem:[%s149 + $0x38] sm:$0xff] %v164
                %v166 = vld [vmem:[%s148 + $0x80] sm:$0xff]
                %167 = vst [vmem:[%s149 + $0x40] sm:$0xff] %v166
                %v168 = vld [vmem:[%s148 + $0x88] sm:$0xff]
                %169 = vst [vmem:[%s149 + $0x48] sm:$0xff] %v168
              $region41: #{conv2d_pallas.1} parent=35 // loop_footer
                %s147 = sadd.s32 1, %s143
              $region42: #{conv2d_pallas.1} parent=35 // loop_footer_branch
                %142 = sbr.rel target = $region38
              $region43: #{conv2d_pallas.1} parent=35 // loop_exit
                _
            $region36: #{conv2d_pallas.1} parent=31 // pred_fallthru
              _
            // Predicated region
            $region44: #{conv2d_pallas.1} parent=31 // pred_check
              _
            $region45: #{conv2d_pallas.1} parent=31 // pred_check_branch
              %171 = sbr.rel target = $region47
            $region46: #{conv2d_pallas.1} parent=31 // pred_region
              _
            $region47: #{conv2d_pallas.1} parent=31 // pred_fallthru
              _
          $region32: #{conv2d_pallas.1} parent=27 // pred_fallthru
            _
          %172 = vnop
        $region28: #{conv2d_pallas.1} parent=23 // pred_fallthru
          _
      $region24: #{conv2d_pallas.1} parent=5 // pred_fallthru
        _
      %p173 = scmp.le.s32.totalorder 1, %s9
      %p174 = scmp.lt.s32.totalorder %s9, 3
      %p175 = pnand %p173, %p174
      %p176 = pneg %p175
      // Predicated region
      $region48: #{conv2d_pallas.1} parent=5 // pred_check
        _
      $region49: #{conv2d_pallas.1} parent=5 // pred_check_branch
        %178 = sbr.rel (%p175) target = $region51
      $region50: #{conv2d_pallas.1} parent=5 // pred_region
        %s179 = ssub.s32 %s9, 1
        %s180 = sand.u32 %s43, 1
        %s181 = sand.u32 %s43, 1
        %s182 = smul.addr %s181, 80
        %s183 = scalar_lea.vmem [#allocation2], %s182
        // Predicated region
        $region52: #{conv2d_pallas.1} parent=50 // pred_check
          %p184 = pneg %p56
        $region53: #{conv2d_pallas.1} parent=50 // pred_check_branch
          %186 = sbr.rel (%p184) target = $region55
        $region54: #{conv2d_pallas.1} parent=50 // pred_region
          _
        $region55: #{conv2d_pallas.1} parent=50 // pred_fallthru
          _
        %p187 = pneg %p30
        %p188 = pneg %p27
        %s189 = sand.u32 %s43, 1
        %s190 = sand.u32 %s43, 1
        %s191 = smul.addr %s190, 80
        %s192 = scalar_lea.vmem [#allocation2], %s191
        %p193 = pneg %p56
        %p194 = pneg %p53
        %p195 = pneg %p77
        %p196 = pneg %p74
        %p197 = pneg %p103
        %p198 = pneg %p100
        %s199 = smul.u32 2, %s14
        %p200 = scmp.lt.s32.totalorder %s199, 3
        %s201 = scalar_select %p200, %s199, 3
        %s202 = smul.addr %s201, 8
        %s203 = scalar_lea.vmem %s3, %s202
        %s204 = smul.u32 2, %s14
        %s205 = smul.u32 2, %s14
        %p206 = scmp.lt.s32.totalorder %s205, 3
        %s207 = scalar_select %p206, %s205, 3
        %s208 = smul.addr %s207, 8
        %s209 = scalar_lea.vmem %s3, %s208
        %s210 = smul.u32 2, %s14
        %v211 = vld [vmem:[%s0] sm:$0xff]
        %v212 = vld [vmem:[%s183] sm:$0xff]
        %v213 = vld [vmem:[%s183 + $0x8] sm:$0xff]
        %v214 = vld [vmem:[%s183 + $0x10] sm:$0xff]
        %v215 = vld [vmem:[%s183 + $0x18] sm:$0xff]
        %v216 = vld [vmem:[%s183 + $0x20] sm:$0xff]
        %v217 = vld [vmem:[%s183 + $0x28] sm:$0xff]
        %v218 = vld [vmem:[%s183 + $0x30] sm:$0xff]
        %v219 = vld [vmem:[%s183 + $0x38] sm:$0xff]
        %v220 = vld [vmem:[%s183 + $0x40] sm:$0xff]
        %v221 = vld [vmem:[%s183 + $0x48] sm:$0xff]
        %v222 = vld [vmem:[%s2] sm:$0xff]
        %224 = vset.pattern.permute.xlu0 0
        %225 = vperm.xlu0 %224, %v222
        %v226 = vpop.permute.xlu0 %225
        %vm228 = vcmask 326656
        %v230 = vsel %vm228, %v211, 0
        %232 = vmatprep.subr.mxu0 0.0
        %233 = vmatpush1.msra.mxu0 0.0
        %234 = vmatprep.subr.mxu0 0.0
        %235 = vmatpush1.msra.mxu0 0.0
        %236 = vmatprep.subr.mxu0 0.0
        %237 = vmatpush1.msra.mxu0 0.0
        %238 = vmatprep.subr.mxu0 0.0
        %239 = vmatpush1.msra.mxu0 0.0
        %240 = vmatprep.subr.mxu0 0.0
        %241 = vmatpush1.msra.mxu0 0.0
        %242 = vmatprep.subr.mxu0 0.0
        %243 = vmatpush1.msra.mxu0 0.0
        %244 = vmatprep.subr.mxu0 0.0
        %245 = vmatpush1.msra.mxu0 0.0
        %246 = vmatprep.subr.mxu0 0.0
        %247 = vmatpush1.msra.mxu0 0.0
        %248 = vmatprep.subr.mxu0 0.0
        %249 = vmatpush1.msra.mxu0 0.0
        %250 = vmatprep.subr.mxu0 0.0
        %251 = vmatpush1.msra.mxu0 0.0
        %252 = vmatprep.subr.mxu0 0.0
        %253 = vmatpush1.msra.mxu0 0.0
        %254 = vmatprep.subr.mxu0 %v221
        %255 = vmatpush1.msra.mxu0 %v220
        %256 = vmatprep.subr.mxu0 %v219
        %257 = vmatpush1.msra.mxu0 %v218
        %258 = vmatprep.subr.mxu0 %v217
        %259 = vmatpush1.msra.mxu0 %v216
        %260 = vmatprep.subr.mxu0 %v215
        %261 = vmatpush1.msra.mxu0 %v214
        %262 = vmatprep.subr.mxu0 %v213
        %263 = vmatpush1.msra.mxu0 %v212
        %264 = vmatprep.subr.mxu0 0.0
        %265 = vmatpush2.msra.mxu0 0.0
        %266 = vmatprep.subr.mxu0 0.0
        %267 = vmatpush2.msra.mxu0 0.0
        %268 = vmatprep.subr.mxu0 0.0
        %269 = vmatpush2.msra.mxu0 0.0
        %270 = vmatprep.subr.mxu0 0.0
        %271 = vmatpush2.msra.mxu0 0.0
        %272 = vmatprep.subr.mxu0 0.0
        %273 = vmatpush2.msra.mxu0 0.0
        %274 = vmatprep.subr.mxu0 0.0
        %275 = vmatpush2.msra.mxu0 0.0
        %276 = vmatprep.subr.mxu0 0.0
        %277 = vmatpush2.msra.mxu0 0.0
        %278 = vmatprep.subr.mxu0 0.0
        %279 = vmatpush2.msra.mxu0 0.0
        %280 = vmatprep.subr.mxu0 0.0
        %281 = vmatpush2.msra.mxu0 0.0
        %282 = vmatprep.subr.mxu0 0.0
        %283 = vmatpush2.msra.mxu0 0.0
        %284 = vmatprep.subr.mxu0 0.0
        %285 = vmatpush2.msra.mxu0 0.0
        %286 = vmatprep.subr.mxu0 0.0
        %287 = vmatpush2.msra.mxu0 0.0
        %288 = vmatprep.subr.mxu0 0.0
        %289 = vmatpush2.msra.mxu0 0.0
        %290 = vmatprep.subr.mxu0 0.0
        %291 = vmatpush2.msra.mxu0 0.0
        %292 = vmatprep.subr.mxu0 0.0
        %293 = vmatpush2.msra.mxu0 0.0
        %294 = vmatprep.subr.mxu0 0.0
        %295 = vmatpush2.msra.mxu0 0.0
        %296 = vmatprep.mubr.f32.mxu0 0.0
        %297 = vmatmul.mubr.f32.gmra.mxu0 %v230
        %v298 = vpop.f32.mrf.mxu0
        %v299 = vadd.f32 %v226, %v298
        %v300 = vpop.f32.mrf.mxu0
        %v301 = vadd.f32 %v226, %v300
        %302 = vdwg.mxu0
        %303 = vst [vmem:[%s209] sm:$0xff] %v299
        %304 = vst [vmem:[%s209 + $0x8] sm:$0xff] %v301
        %s305 = smul.u32 2, %s14
        %p306 = scmp.lt.s32.totalorder %s305, 3
        %s307 = scalar_select %p306, %s305, 3
        %s308 = smul.addr %s307, 8
        %s309 = scalar_lea.vmem %s3, %s308
        // Predicated region
        $region56: #{conv2d_pallas.1} parent=50 // pred_check
          %p310 = pneg %p100
        $region57: #{conv2d_pallas.1} parent=50 // pred_check_branch
          %312 = sbr.rel (%p310) target = $region59
        $region58: #{conv2d_pallas.1} parent=50 // pred_region
          %s313 = smul.u32 2, %s14
        $region59: #{conv2d_pallas.1} parent=50 // pred_fallthru
          _
      $region51: #{conv2d_pallas.1} parent=5 // pred_fallthru
        _
      %p314 = scmp.le.s32.totalorder 2, %s9
      // Predicated region
      $region60: #{conv2d_pallas.1} parent=5 // pred_check
        %p315 = pneg %p314
      $region61: #{conv2d_pallas.1} parent=5 // pred_check_branch
        %317 = sbr.rel (%p315) target = $region63
      $region62: #{conv2d_pallas.1} parent=5 // pred_region
        %s318 = ssub.s32 %s9, 2
        // Predicated region
        $region64: #{conv2d_pallas.1} parent=62 // pred_check
          %p319 = pneg %p106
        $region65: #{conv2d_pallas.1} parent=62 // pred_check_branch
          %321 = sbr.rel (%p319) target = $region67
        $region66: #{conv2d_pallas.1} parent=62 // pred_region
          %s322 = smul.u32 2, %s15
          %p323 = scmp.lt.s32.totalorder %s322, 3
          %s324 = scalar_select %p323, %s322, 3
          %s325 = smul.addr %s324, 8
          %s326 = scalar_lea.vmem %s3, %s325
        $region67: #{conv2d_pallas.1} parent=62 // pred_fallthru
          _
      $region63: #{conv2d_pallas.1} parent=5 // pred_fallthru
        _
    $region6: #{conv2d_pallas.1} parent=1 // loop_footer
      %s13 = sadd.s32 1, %s9
    $region7: #{conv2d_pallas.1} parent=1 // loop_footer_branch
      %8 = sbr.rel target = $region3
    $region8: #{conv2d_pallas.1} parent=1 // loop_exit
      _

</llo_original>
